<compile_context>
chip_gen: v6e
topology: v6e:2x2x1
jax: 0.10.0
libtpu: 0.0.40
codegen_flags: <defaults>
</compile_context>

<pallas_src>
import jax
import jax.numpy as jnp
from jax import lax
from jax.experimental import pallas as pl
from jax.experimental.pallas import tpu as pltpu

_LANE = 128
_SUBLANE = 8
_MK = 128  # K-chunk width (lane aligned) used when M > 128


def _make_kernel(bt, mk, n_chunks, npad):
    def kernel(num_gt_ref, idx_ref, mask_ref, gt_ref, pred_ref, out_ref, acc_ref):
        # num_gt_ref: SMEM (Bp,) int32   real GT-box count per image
        # idx_ref   : (bt,   Np) int32   gather index per proposal
        # mask_ref  : (bt,   Np) f32     1.0 iff the image had an 'original_gt'
        # gt_ref    : (bt*4, Mp) f32     GT boxes, channel-major, image-flattened rows
        # pred_ref  : (bt*4, Np) f32     predicted boxes, channel-major, image-flattened rows
        # out_ref   : (bt,   Np) f32     per-proposal loss
        # acc_ref   : VMEM (4, Np) f32   K-chunk accumulator (used only when n_chunks > 1)
        step = pl.program_id(0)
        # Hoisted once per grid step; shared by every image and every K chunk.
        row = lax.broadcasted_iota(jnp.int32, (mk, npad), 0)

        loss_rows = []
        for b in range(bt):  # static unroll: every ref slice below has a static start
            idx_b = idx_ref[pl.ds(b, 1), :]                              # (1, Np)
            pred_b = pred_ref[pl.ds(4 * b, 4), :]                        # (4, Np)
            if n_chunks == 1:
                # One-hot gather on the MXU; keep everything f32 so the gather is exact.
                onehot_t = (row == idx_b).astype(jnp.float32)            # (M, Np)
                gathered_t = jnp.dot(gt_ref[pl.ds(4 * b, 4), :], onehot_t,
                                     preferred_element_type=jnp.float32)  # (4, Np)
            else:
                ng = num_gt_ref[step * bt + b]
                acc_ref[...] = jnp.zeros_like(acc_ref)

                def chunk_body(c, carry):
                    # Skip chunks entirely past the real GT count: VPU work (the one-hot
                    # compare) then scales with the true count, not the padded M.
                    @pl.when(c * mk < ng)
                    def _():
                        onehot_t = (row == (idx_b - c * mk)).astype(jnp.float32)  # (mk, Np)
                        cs = pl.multiple_of(c * mk, mk)                           # lane-aligned
                        gt_chunk = gt_ref[pl.ds(4 * b, 4), pl.ds(cs, mk)]          # (4, mk)
                        acc_ref[...] += jnp.dot(gt_chunk, onehot_t,
                                                preferred_element_type=jnp.float32)
                    return carry

                lax.fori_loop(0, n_chunks, chunk_body, 0)
                gathered_t = acc_ref[...]                                 # (4, Np)

            diff = gathered_t - pred_b                                    # (4, Np)
            loss_rows.append(jnp.sum(diff * diff, axis=0, keepdims=True))  # (1, Np)

        # One lane-dense full-block store (unmasked vst) instead of bt partial stores.
        loss = loss_rows[0] if bt == 1 else jnp.concatenate(loss_rows, axis=0)  # (bt, Np)
        # where (not multiply): masked-out / padded images never leak NaN or Inf.
        out_ref[...] = jnp.where(mask_ref[...] != 0.0, loss, 0.0)

    return kernel


def _is_v7x():
    try:
        kind = (jax.devices()[0].device_kind or "").lower()
    except Exception:
        return False
    return ("v7" in kind) or ("7x" in kind)


def _legal_bt(batch, target):
    """bt must be a multiple of 8 or equal the batch, so every block's second-minor
    dim is either 8-divisible or the full array extent (Pallas (8,128) tiling rule)."""
    target = max(1, min(int(target), batch))
    if target >= batch:
        return batch
    bt = (target // _SUBLANE) * _SUBLANE
    if bt == 0:
        bt = _SUBLANE if batch > _SUBLANE else batch
    return bt


def _step_vmem_bytes(bt, npad, mpad, mk):
    # Double-buffered input/output blocks (idx + mask + out + gt + pred), all 4-byte.
    dbl = 2 * 4 * (3 * bt * npad + 4 * bt * mpad + 4 * bt * npad)
    scratch = 4 * _SUBLANE * npad            # (4, Np) accumulator, sublane-padded to 8
    temps = 4 * 3 * mk * npad                # live one-hot / compare temporaries
    return dbl + scratch + temps


def box_projection_origin_loss(pred_boxes, gt_boxes, original_gt, mask,
                               *, num_gt=None, images_per_step=8):
    """pred_boxes : (B, N, 4)  predicted (proposal) boxes
       gt_boxes   : (B, M, 4)  ground-truth boxes (zero rows for images without GT)
       original_gt: (B, N) int index into M of the GT box each proposal was noised from
       mask       : (B, N) bool True iff the image had an 'original_gt' entry
       num_gt     : optional (B,) int real GT count per image (rows >= count are padding);
                    defaults to M for every image.
       returns    : (B, N) f32 per-proposal origin loss (caller adds into loss_dict).
       Note: an out-of-range index gathers zeros (PyTorch's gather would raise); clamp
       upstream if such indices can occur."""
    B, N, C = pred_boxes.shape
    assert C == 4
    M = gt_boxes.shape[1]

    # Lane-dense: proposals on the lane axis, padded to a multiple of 128.
    npad = -(-N // _LANE) * _LANE

    # GT (K) chunking: single chunk for small M, 128-wide lane-aligned chunks otherwise
    # (finer chunks -> better skipping when images have far fewer boxes than padded M).
    if M <= _MK:
        mk, mpad, n_chunks = M, M, 1
    else:
        mk = _MK
        mpad = -(-M // mk) * mk
        n_chunks = mpad // mk

    # Generation-aware images-per-step and VMEM budget.
    v7x = _is_v7x()
    vmem_budget = (40 if v7x else 80) * 1024 * 1024
    vmem_cap = (48 if v7x else 100) * 1024 * 1024
    if v7x and B >= 2:
        target = min(int(images_per_step), -(-B // 2))   # keep >= 2 'parallel' steps
    else:
        target = min(int(images_per_step), B)            # single TC: no reason to split
    bt = _legal_bt(B, target)
    while bt > 1 and _step_vmem_bytes(bt, npad, mpad, mk) > vmem_budget:
        smaller = _legal_bt(B, bt // 2)
        if smaller == bt:
            break
        bt = smaller

    bpad = -(-B // bt) * bt
    grid = bpad // bt

    f32 = jnp.float32
    # Channel-major, image-flattened rows: row 4*b + c holds channel c of image b.
    # astype folds into the transpose copy; the reshape of the contiguous result is free.
    pred2 = jnp.transpose(pred_boxes.astype(f32), (0, 2, 1)).reshape(B * 4, N)
    gt2 = jnp.transpose(gt_boxes.astype(f32), (0, 2, 1)).reshape(B * 4, M)
    idx2 = original_gt.astype(jnp.int32)
    msk2 = mask.astype(f32)
    ng2 = (jnp.full((B,), M, jnp.int32) if num_gt is None
           else jnp.asarray(num_gt).astype(jnp.int32))

    # Pad only when needed.  Padded lanes / padded images carry mask == 0 and
    # num_gt == 0, so they contribute exact zeros and (when chunked) skip all work.
    if bpad != B or npad != N:
        pred2 = jnp.pad(pred2, ((0, (bpad - B) * 4), (0, npad - N)))
        idx2 = jnp.pad(idx2, ((0, bpad - B), (0, npad - N)))
        msk2 = jnp.pad(msk2, ((0, bpad - B), (0, npad - N)))
    if bpad != B or mpad != M:
        gt2 = jnp.pad(gt2, ((0, (bpad - B) * 4), (0, mpad - M)))
    if bpad != B:
        ng2 = jnp.pad(ng2, ((0, bpad - B),))

    needed = _step_vmem_bytes(bt, npad, mpad, mk)
    vmem_limit = int(min(vmem_cap, max(32 * 1024 * 1024, needed + needed // 4)))

    out = pl.pallas_call(
        _make_kernel(bt, mk, n_chunks, npad),
        out_shape=jax.ShapeDtypeStruct((bpad, npad), f32),
        grid_spec=pltpu.PrefetchScalarGridSpec(
            num_scalar_prefetch=1,
            grid=(grid,),
            in_specs=[
                pl.BlockSpec((bt, npad), lambda i, ng: (i, 0)),      # idx
                pl.BlockSpec((bt, npad), lambda i, ng: (i, 0)),      # mask
                pl.BlockSpec((bt * 4, mpad), lambda i, ng: (i, 0)),  # gt   (channel-major rows)
                pl.BlockSpec((bt * 4, npad), lambda i, ng: (i, 0)),  # pred (channel-major rows)
            ],
            out_specs=pl.BlockSpec((bt, npad), lambda i, ng: (i, 0)),
            scratch_shapes=[pltpu.VMEM((4, npad), f32)],
        ),
        compiler_params=pltpu.CompilerParams(
            dimension_semantics=("parallel",),
            vmem_limit_bytes=vmem_limit,
        ),
    )(ng2, idx2, msk2, gt2, pred2)

    if bpad == B and npad == N:
        return out            # no padding added -> no extra slice copy
    return out[:B, :N]


def _reference(pred_boxes, gt_boxes, original_gt, mask):
    gathered = jnp.take_along_axis(
        gt_boxes, original_gt.astype(jnp.int32)[..., None], axis=1)
    loss = jnp.sum((gathered - pred_boxes.astype(jnp.float32)) ** 2, axis=-1)
    return jnp.where(mask, loss, jnp.zeros_like(loss))


if __name__ == "__main__":
    key = jax.random.PRNGKey(0)

    # ---- Test 1: small deterministic example mirroring the PyTorch forward's two
    # branches (image 0 has 'original_gt', image 1 does not). ----
    B, N, M = 2, 8, 8
    k1, k2, k3 = jax.random.split(key, 3)
    pred_boxes = jax.random.uniform(k1, (B, N, 4), jnp.float32) * 32.0
    gt_boxes = jax.random.uniform(k2, (B, M, 4), jnp.float32) * 32.0
    original_gt = jax.random.randint(k3, (B, N), 0, M, jnp.int32)
    gt_boxes = gt_boxes.at[1].set(0.0)
    original_gt = original_gt.at[1].set(0)
    mask = jnp.array([[True] * N, [False] * N], dtype=jnp.bool_)

    out = jax.block_until_ready(
        box_projection_origin_loss(pred_boxes, gt_boxes, original_gt, mask))
    ref = _reference(pred_boxes, gt_boxes, original_gt, mask)
    assert out.shape == (B, N)
    assert bool(jnp.isfinite(out).all())
    assert bool(jnp.allclose(out, ref, atol=1e-4, rtol=1e-4))

    # ---- Test 2: exercises the K-chunked path with scalar-prefetched per-image GT
    # counts (M > 128, ragged counts, one image without 'original_gt'). ----
    B2, N2, M2 = 4, 40, 200
    k4, k5, k6 = jax.random.split(jax.random.PRNGKey(1), 3)
    pred2 = jax.random.uniform(k4, (B2, N2, 4), jnp.float32) * 64.0
    gt2 = jax.random.uniform(k5, (B2, M2, 4), jnp.float32) * 64.0
    num_gt2 = jnp.array([3, 0, 200, 37], jnp.int32)
    # indices stay below each image's real count (0 for the maskless image)
    u = jax.random.uniform(k6, (B2, N2), jnp.float32)
    idx2 = jnp.floor(u * jnp.maximum(num_gt2, 1)[:, None]).astype(jnp.int32)
    gt2 = gt2.at[1].set(0.0)
    mask2 = jnp.array([[True] * N2, [False] * N2, [True] * N2, [True] * N2], jnp.bool_)

    out2 = jax.block_until_ready(
        box_projection_origin_loss(pred2, gt2, idx2, mask2, num_gt=num_gt2))
    ref2 = _reference(pred2, gt2, idx2, mask2)
    assert out2.shape == (B2, N2)
    assert bool(jnp.isfinite(out2).all())
    assert bool(jnp.allclose(out2, ref2, atol=1e-3, rtol=1e-4))

    # The per-image loss rows would be added into each image's loss_dict['origin_loss']
    # by the caller; that dict/Instances plumbing is host-side glue, not kernel work.
    print("KERNEL_OK")
</pallas_src>

<mosaic_0001>
module attributes {stable_mosaic.version = 11 : i64} {
  func.func @kernel(%arg0: i32, %arg1: memref<2xi32, #tpu.memory_space<smem>>, %arg2: memref<2x128xi32, #tpu.memory_space<vmem>>, %arg3: memref<2x128xf32, #tpu.memory_space<vmem>>, %arg4: memref<8x8xf32, #tpu.memory_space<vmem>>, %arg5: memref<8x128xf32, #tpu.memory_space<vmem>>, %arg6: memref<2x128xf32, #tpu.memory_space<vmem>>, %arg7: memref<4x128xf32, #tpu.memory_space<vmem>>) attributes {dimension_semantics = [#tpu.dimension_semantics<parallel>], iteration_bounds = array<i64: 1>, scalar_prefetch = 1 : i64, scratch_operands = 1 : i64, tpu.core_type = #tpu.core_type<tc>, window_params = [{transform_indices = @transform_0, window_bounds = array<i64: 2, 128>}, {transform_indices = @transform_1, window_bounds = array<i64: 2, 128>}, {transform_indices = @transform_2, window_bounds = array<i64: 8, 8>}, {transform_indices = @transform_3, window_bounds = array<i64: 8, 128>}, {transform_indices = @transform_4, window_bounds = array<i64: 2, 128>}]} {
    %0 = tpu.iota {dimensions = array<i32: 0>} : vector<8x128xi32>
    %c0 = arith.constant 0 : index
    %c0_0 = arith.constant 0 : index
    %1 = vector.load %arg2[%c0, %c0_0] : memref<2x128xi32, #tpu.memory_space<vmem>>, vector<1x128xi32>
    %c0_1 = arith.constant 0 : index
    %c0_2 = arith.constant 0 : index
    %2 = vector.load %arg5[%c0_1, %c0_2] : memref<8x128xf32, #tpu.memory_space<vmem>>, vector<4x128xf32>
    %3 = vector.broadcast %1 : vector<1x128xi32> to vector<8x128xi32>
    %4 = arith.cmpi eq, %0, %3 : vector<8x128xi32>
    %5 = arith.extui %4 : vector<8x128xi1> to vector<8x128xi32>
    %6 = arith.sitofp %5 : vector<8x128xi32> to vector<8x128xf32>
    %c0_3 = arith.constant 0 : index
    %c0_4 = arith.constant 0 : index
    %7 = vector.load %arg4[%c0_3, %c0_4] : memref<8x8xf32, #tpu.memory_space<vmem>>, vector<4x8xf32>
    %cst = arith.constant dense<0.000000e+00> : vector<4x128xf32>
    %8 = tpu.matmul %7, %6, %cst {dimension_numbers = #tpu.dot_dimension_numbers<[1], [0], [0], [1], [0, 0, 1, 1], [], []>} : vector<4x8xf32>, vector<8x128xf32>, vector<4x128xf32> -> vector<4x128xf32>
    %9 = arith.subf %8, %2 : vector<4x128xf32>
    %10 = arith.mulf %9, %9 : vector<4x128xf32>
    %cst_5 = arith.constant dense<0.000000e+00> : vector<128xf32>
    %11 = vector.multi_reduction <add>, %10, %cst_5 [0] : vector<4x128xf32> to vector<128xf32>
    %12 = vector.shape_cast %11 : vector<128xf32> to vector<1x128xf32>
    %c1 = arith.constant 1 : index
    %c0_6 = arith.constant 0 : index
    %13 = vector.load %arg2[%c1, %c0_6] : memref<2x128xi32, #tpu.memory_space<vmem>>, vector<1x128xi32>
    %c4 = arith.constant 4 : index
    %c0_7 = arith.constant 0 : index
    %14 = vector.load %arg5[%c4, %c0_7] : memref<8x128xf32, #tpu.memory_space<vmem>>, vector<4x128xf32>
    %15 = vector.broadcast %13 : vector<1x128xi32> to vector<8x128xi32>
    %16 = arith.cmpi eq, %0, %15 : vector<8x128xi32>
    %17 = arith.extui %16 : vector<8x128xi1> to vector<8x128xi32>
    %18 = arith.sitofp %17 : vector<8x128xi32> to vector<8x128xf32>
    %c4_8 = arith.constant 4 : index
    %c0_9 = arith.constant 0 : index
    %19 = vector.load %arg4[%c4_8, %c0_9] : memref<8x8xf32, #tpu.memory_space<vmem>>, vector<4x8xf32>
    %cst_10 = arith.constant dense<0.000000e+00> : vector<4x128xf32>
    %20 = tpu.matmul %19, %18, %cst_10 {dimension_numbers = #tpu.dot_dimension_numbers<[1], [0], [0], [1], [0, 0, 1, 1], [], []>} : vector<4x8xf32>, vector<8x128xf32>, vector<4x128xf32> -> vector<4x128xf32>
    %21 = arith.subf %20, %14 : vector<4x128xf32>
    %22 = arith.mulf %21, %21 : vector<4x128xf32>
    %cst_11 = arith.constant dense<0.000000e+00> : vector<128xf32>
    %23 = vector.multi_reduction <add>, %22, %cst_11 [0] : vector<4x128xf32> to vector<128xf32>
    %24 = vector.shape_cast %23 : vector<128xf32> to vector<1x128xf32>
    %25 = tpu.concatenate %12, %24 in 0 : vector<1x128xf32>, vector<1x128xf32> -> vector<2x128xf32>
    %c0_12 = arith.constant 0 : index
    %c0_13 = arith.constant 0 : index
    %26 = vector.load %arg3[%c0_12, %c0_13] : memref<2x128xf32, #tpu.memory_space<vmem>>, vector<2x128xf32>
    %cst_14 = arith.constant 0.000000e+00 : f32
    %27 = vector.broadcast %cst_14 : f32 to vector<2x128xf32>
    %28 = arith.cmpf one, %26, %27 : vector<2x128xf32>
    %cst_15 = arith.constant 0.000000e+00 : f32
    %29 = vector.broadcast %cst_15 : f32 to vector<2x128xf32>
    %30 = arith.select %28, %25, %29 : vector<2x128xi1>, vector<2x128xf32>
    %c0_16 = arith.constant 0 : index
    %c0_17 = arith.constant 0 : index
    %31 = vector.load %arg6[%c0_16, %c0_17] : memref<2x128xf32, #tpu.memory_space<vmem>>, vector<2x128xf32>
    tpu.vector_store %arg6[%c0_16, %c0_17], %30 {strides = array<i32>} : memref<2x128xf32, #tpu.memory_space<vmem>>, vector<2x128xf32>,
    return
  }
  func.func @transform_0(%arg0: i32, %arg1: memref<2xi32, #tpu.memory_space<smem>>) -> (i32, i32) {
    %c0_i32 = arith.constant 0 : i32
    %c0_i32_0 = arith.constant 0 : i32
    return %arg0, %c0_i32 : i32, i32
  }
  func.func @transform_1(%arg0: i32, %arg1: memref<2xi32, #tpu.memory_space<smem>>) -> (i32, i32) {
    %c0_i32 = arith.constant 0 : i32
    %c0_i32_0 = arith.constant 0 : i32
    return %arg0, %c0_i32 : i32, i32
  }
  func.func @transform_2(%arg0: i32, %arg1: memref<2xi32, #tpu.memory_space<smem>>) -> (i32, i32) {
    %c0_i32 = arith.constant 0 : i32
    %c0_i32_0 = arith.constant 0 : i32
    return %arg0, %c0_i32 : i32, i32
  }
  func.func @transform_3(%arg0: i32, %arg1: memref<2xi32, #tpu.memory_space<smem>>) -> (i32, i32) {
    %c0_i32 = arith.constant 0 : i32
    %c0_i32_0 = arith.constant 0 : i32
    return %arg0, %c0_i32 : i32, i32
  }
  func.func @transform_4(%arg0: i32, %arg1: memref<2xi32, #tpu.memory_space<smem>>) -> (i32, i32) {
    %c0_i32 = arith.constant 0 : i32
    %c0_i32_0 = arith.constant 0 : i32
    return %arg0, %c0_i32 : i32, i32
  }
}

</mosaic_0001>

<llo_original>
// kernel: tpu_custom_call.1
$region0: #{tpu_custom_call.1}
  #allocation0 [shape = 'u32[]', space=smem, size = 0x4, offset = 0x4, fixed_abs, tag = 'smem constant byte address 0x4 - core index']
  #allocation1 [shape = 'u32[144,128]{1,0:T(1,128)}', space=vmem, size = 0x12000, scoped, tag = 'internal scratch']
  #allocation2 [shape = 'f32[4,128]{1,0:T(4,128)}', space=vmem, size = 0x800, scoped, tag = 'scratch operand']
  #allocation3 [shape = 's32[1]{0}', space=sflag, size = 0x4, scoped, tag = 'scoped memory for tpu_custom_call.1']
  #allocation4 [shape = 'u8[512]{0}', space=smem, size = 0x200, scoped, tag = 'prefetched SMEM operand 0']
  %s0 = inlined_call_operand.hbm [shape: s32[2], index: 0, kind: input, shape index: {}]
  %s1 = inlined_call_operand.hbm [shape: s32[2,128], index: 1, kind: input, shape index: {}]
  %s2 = inlined_call_operand.vmem [shape: f32[2,128], index: 2, kind: input, shape index: {}]
  %s3 = inlined_call_operand.hbm [shape: f32[8,8], index: 3, kind: input, shape index: {}]
  %s4 = inlined_call_operand.hbm [shape: f32[8,128], index: 4, kind: input, shape index: {}]
  %s5 = inlined_call_operand.hbm [shape: f32[2,128], index: 5, kind: output, shape index: {}]
  %s6 = sld [smem:[#allocation0]]
  $region38: #{tpu_custom_call.1} parent=0
    _
  %s8 = ssub.s32 1, %s6
  %s9 = scalar_select 0, %s8, %s6
  %11 = dma.hbm_to_smem %s0, 16, [#allocation4], [#allocation3]
  %12 = dma.done [#allocation3], 16
  %13 = sfence
  $region1: #{tpu_custom_call.1} parent=0
    #allocation5 [shape = 'u8[1024]{0}', space=vmem, size = 0x400, scoped, tag = 'input window, operand 1, single buffered']
    #allocation6 [shape = 's32[1]{0}', space=sflag, size = 0x4, scoped, tag = 'scoped memory for tpu_custom_call.1']
    #allocation7 [shape = 's32[1]{0}', space=sflag, size = 0x4, scoped, tag = 'scoped memory for tpu_custom_call.1']
    #allocation8 [shape = 'u8[4096]{0}', space=vmem, size = 0x1000, scoped, tag = 'input window, operand 3, single buffered']
    #allocation9 [shape = 's32[1]{0}', space=sflag, size = 0x4, scoped, tag = 'scoped memory for tpu_custom_call.1']
    #allocation10 [shape = 'u8[4096]{0}', space=vmem, size = 0x1000, scoped, tag = 'input window, operand 4, single buffered']
    #allocation11 [shape = 'u8[1024]{0}', space=vmem, size = 0x400, scoped, tag = 'output window, operand 0, single buffered']
    %14 = vsyncpa [#allocation6], 0
    %15 = vsyncpa [#allocation9], 0
    %16 = vsyncpa [#allocation7], 0
    // Predicated region
    $region2: #{tpu_custom_call.1} parent=1 // pred_check
      _
    $region3: #{tpu_custom_call.1} parent=1 // pred_check_branch
      %18 = sbr.rel (0) target = $region5
    $region4: #{tpu_custom_call.1} parent=1 // pred_region
      %s20 = ssub.s32 32, 32
      %21 = vsyncadd [#allocation6], %s20
      %s23 = sshll.u32 [#allocation5], 4
      %s24 = int_to_ptr.vmem [resolvable:$true] %s23
      %26 = dma.hbm_to_vmem [thread:$0]  %s1, 32, %s24, [#allocation6]
    $region5: #{tpu_custom_call.1} parent=1 // pred_fallthru
      _
    // Predicated region
    $region6: #{tpu_custom_call.1} parent=1 // pred_check
      _
    $region7: #{tpu_custom_call.1} parent=1 // pred_check_branch
      %28 = sbr.rel (0) target = $region9
    $region8: #{tpu_custom_call.1} parent=1 // pred_region
      _
    $region9: #{tpu_custom_call.1} parent=1 // pred_fallthru
      _
    // Predicated region
    $region10: #{tpu_custom_call.1} parent=1 // pred_check
      _
    $region11: #{tpu_custom_call.1} parent=1 // pred_check_branch
      %30 = sbr.rel (0) target = $region13
    $region12: #{tpu_custom_call.1} parent=1 // pred_region
      %s32 = ssub.s32 128, 128
      %33 = vsyncadd [#allocation9], %s32
      %s35 = sshll.u32 [#allocation8], 4
      %s36 = int_to_ptr.vmem [resolvable:$true] %s35
      %38 = dma.hbm_to_vmem [thread:$0]  %s3, 128, %s36, [#allocation9]
    $region13: #{tpu_custom_call.1} parent=1 // pred_fallthru
      _
    // Predicated region
    $region14: #{tpu_custom_call.1} parent=1 // pred_check
      _
    $region15: #{tpu_custom_call.1} parent=1 // pred_check_branch
      %40 = sbr.rel (0) target = $region17
    $region16: #{tpu_custom_call.1} parent=1 // pred_region
      %s42 = ssub.s32 128, 128
      %43 = vsyncadd [#allocation9], %s42
      %s45 = sshll.u32 [#allocation10], 4
      %s46 = int_to_ptr.vmem [resolvable:$true] %s45
      %48 = dma.hbm_to_vmem [thread:$0]  %s4, 128, %s46, [#allocation9]
    $region17: #{tpu_custom_call.1} parent=1 // pred_fallthru
      _
    // Predicated region
    $region18: #{tpu_custom_call.1} parent=1 // pred_check
      _
    $region19: #{tpu_custom_call.1} parent=1 // pred_check_branch
      %50 = sbr.rel (0) target = $region21
    $region20: #{tpu_custom_call.1} parent=1 // pred_region
      %51 = dma.done [#allocation6], 32
    $region21: #{tpu_custom_call.1} parent=1 // pred_fallthru
      _
    // Predicated region
    $region22: #{tpu_custom_call.1} parent=1 // pred_check
      _
    $region23: #{tpu_custom_call.1} parent=1 // pred_check_branch
      %53 = sbr.rel (0) target = $region25
    $region24: #{tpu_custom_call.1} parent=1 // pred_region
      %54 = dma.done [#allocation9], 128
    $region25: #{tpu_custom_call.1} parent=1 // pred_fallthru
      _
    // Predicated region
    $region26: #{tpu_custom_call.1} parent=1 // pred_check
      _
    $region27: #{tpu_custom_call.1} parent=1 // pred_check_branch
      %56 = sbr.rel (0) target = $region29
    $region28: #{tpu_custom_call.1} parent=1 // pred_region
      %57 = dma.done [#allocation9], 128
    $region29: #{tpu_custom_call.1} parent=1 // pred_fallthru
      _
    %v58 = vlaneseq
    %v59 = vshrl.u32 %v58, 7
    %v60 = vld [vmem:[#allocation5] sm:$0x1]
    %v61 = vld [vmem:[#allocation10] sm:$0xf]
    %v62 = vlaneseq
    %v63 = vshrl.u32 %v62, 7
    %v64 = vsub.s32 0, %v63
    %v65 = vrot.slane %v60, %v64
    %vm66 = vcmp.eq.s32.totalorder %v59, %v65
    %v67 = vsel %vm66, 1, 0
    %v68 = vcvt.s32.f32 %v67
    %v69 = vld [vmem:[#allocation8] sm:$0xf]
    %vm70 = vcmask 64512
    %v72 = vsel %vm70, %v69, 0
    %74 = vmatprep.subr.mxu0 0.0
    %75 = vmatpush1.msra.mxu0 0.0
    %76 = vmatprep.subr.mxu0 0.0
    %77 = vmatpush1.msra.mxu0 0.0
    %78 = vmatprep.subr.mxu0 0.0
    %79 = vmatpush1.msra.mxu0 0.0
    %80 = vmatprep.subr.mxu0 0.0
    %81 = vmatpush1.msra.mxu0 0.0
    %82 = vmatprep.subr.mxu0 0.0
    %83 = vmatpush1.msra.mxu0 0.0
    %84 = vmatprep.subr.mxu0 0.0
    %85 = vmatpush1.msra.mxu0 0.0
    %86 = vmatprep.subr.mxu0 0.0
    %87 = vmatpush1.msra.mxu0 0.0
    %88 = vmatprep.subr.mxu0 0.0
    %89 = vmatpush1.msra.mxu0 0.0
    %90 = vmatprep.subr.mxu0 0.0
    %91 = vmatpush1.msra.mxu0 0.0
    %92 = vmatprep.subr.mxu0 0.0
    %93 = vmatpush1.msra.mxu0 0.0
    %94 = vmatprep.subr.mxu0 0.0
    %95 = vmatpush1.msra.mxu0 0.0
    %96 = vmatprep.subr.mxu0 0.0
    %97 = vmatpush1.msra.mxu0 0.0
    %98 = vmatprep.subr.mxu0 0.0
    %99 = vmatpush1.msra.mxu0 0.0
    %100 = vmatprep.subr.mxu0 0.0
    %101 = vmatpush1.msra.mxu0 0.0
    %102 = vmatprep.subr.mxu0 0.0
    %103 = vmatpush1.msra.mxu0 0.0
    %104 = vmatprep.subr.mxu0 0.0
    %105 = vmatpush1.msra.mxu0 %v68
    %106 = vmatprep.subr.mxu0 0.0
    %107 = vmatpush2.msra.mxu0 0.0
    %108 = vmatprep.subr.mxu0 0.0
    %109 = vmatpush2.msra.mxu0 0.0
    %110 = vmatprep.subr.mxu0 0.0
    %111 = vmatpush2.msra.mxu0 0.0
    %112 = vmatprep.subr.mxu0 0.0
    %113 = vmatpush2.msra.mxu0 0.0
    %114 = vmatprep.subr.mxu0 0.0
    %115 = vmatpush2.msra.mxu0 0.0
    %116 = vmatprep.subr.mxu0 0.0
    %117 = vmatpush2.msra.mxu0 0.0
    %118 = vmatprep.subr.mxu0 0.0
    %119 = vmatpush2.msra.mxu0 0.0
    %120 = vmatprep.subr.mxu0 0.0
    %121 = vmatpush2.msra.mxu0 0.0
    %122 = vmatprep.subr.mxu0 0.0
    %123 = vmatpush2.msra.mxu0 0.0
    %124 = vmatprep.subr.mxu0 0.0
    %125 = vmatpush2.msra.mxu0 0.0
    %126 = vmatprep.subr.mxu0 0.0
    %127 = vmatpush2.msra.mxu0 0.0
    %128 = vmatprep.subr.mxu0 0.0
    %129 = vmatpush2.msra.mxu0 0.0
    %130 = vmatprep.subr.mxu0 0.0
    %131 = vmatpush2.msra.mxu0 0.0
    %132 = vmatprep.subr.mxu0 0.0
    %133 = vmatpush2.msra.mxu0 0.0
    %134 = vmatprep.subr.mxu0 0.0
    %135 = vmatpush2.msra.mxu0 0.0
    %136 = vmatprep.subr.mxu0 0.0
    %137 = vmatpush2.msra.mxu0 0.0
    %138 = vmatprep.mubr.f32.mxu0 0.0
    %139 = vmatmul.mubr.f32.gmra.mxu0 %v72
    %v140 = vpop.f32.mrf.mxu0
    %v141 = vadd.f32 0.0, %v140
    %v142 = vpop.f32.mrf.mxu0
    %143 = vdwg.mxu0
    %v144 = vsub.f32 %v141, %v61
    %v145 = vmul.f32 %v144, %v144
    %vm146 = vcmask 1043456
    %v147 = vsel %vm146, %v145, 0.0
    %v148 = vrot.slane %v147, 4
    %v149 = vadd.f32 %v147, %v148
    %v150 = vrot.slane %v149, 2
    %v151 = vadd.f32 %v149, %v150
    %v152 = vrot.slane %v151, 1
    %v153 = vadd.f32 %v151, %v152
    %v154 = vld [vmem:[#allocation5 + $0x1] sm:$0x1]
    %v155 = vld [vmem:[#allocation10 + $0x4] sm:$0xf]
    %v156 = vlaneseq
    %v157 = vshrl.u32 %v156, 7
    %v158 = vsub.s32 0, %v157
    %v159 = vrot.slane %v154, %v158
    %vm160 = vcmp.eq.s32.totalorder %v59, %v159
    %v161 = vsel %vm160, 1, 0
    %v162 = vcvt.s32.f32 %v161
    %v163 = vld [vmem:[#allocation8 + $0x4] sm:$0xf]
    %v165 = vsel %vm70, %v163, 0
    %167 = vmatprep.subr.mxu0 0.0
    %168 = vmatpush1.msra.mxu0 0.0
    %169 = vmatprep.subr.mxu0 0.0
    %170 = vmatpush1.msra.mxu0 0.0
    %171 = vmatprep.subr.mxu0 0.0
    %172 = vmatpush1.msra.mxu0 0.0
    %173 = vmatprep.subr.mxu0 0.0
    %174 = vmatpush1.msra.mxu0 0.0
    %175 = vmatprep.subr.mxu0 0.0
    %176 = vmatpush1.msra.mxu0 0.0
    %177 = vmatprep.subr.mxu0 0.0
    %178 = vmatpush1.msra.mxu0 0.0
    %179 = vmatprep.subr.mxu0 0.0
    %180 = vmatpush1.msra.mxu0 0.0
    %181 = vmatprep.subr.mxu0 0.0
    %182 = vmatpush1.msra.mxu0 0.0
    %183 = vmatprep.subr.mxu0 0.0
    %184 = vmatpush1.msra.mxu0 0.0
    %185 = vmatprep.subr.mxu0 0.0
    %186 = vmatpush1.msra.mxu0 0.0
    %187 = vmatprep.subr.mxu0 0.0
    %188 = vmatpush1.msra.mxu0 0.0
    %189 = vmatprep.subr.mxu0 0.0
    %190 = vmatpush1.msra.mxu0 0.0
    %191 = vmatprep.subr.mxu0 0.0
    %192 = vmatpush1.msra.mxu0 0.0
    %193 = vmatprep.subr.mxu0 0.0
    %194 = vmatpush1.msra.mxu0 0.0
    %195 = vmatprep.subr.mxu0 0.0
    %196 = vmatpush1.msra.mxu0 0.0
    %197 = vmatprep.subr.mxu0 0.0
    %198 = vmatpush1.msra.mxu0 %v162
    %199 = vmatprep.subr.mxu0 0.0
    %200 = vmatpush2.msra.mxu0 0.0
    %201 = vmatprep.subr.mxu0 0.0
    %202 = vmatpush2.msra.mxu0 0.0
    %203 = vmatprep.subr.mxu0 0.0
    %204 = vmatpush2.msra.mxu0 0.0
    %205 = vmatprep.subr.mxu0 0.0
    %206 = vmatpush2.msra.mxu0 0.0
    %207 = vmatprep.subr.mxu0 0.0
    %208 = vmatpush2.msra.mxu0 0.0
    %209 = vmatprep.subr.mxu0 0.0
    %210 = vmatpush2.msra.mxu0 0.0
    %211 = vmatprep.subr.mxu0 0.0
    %212 = vmatpush2.msra.mxu0 0.0
    %213 = vmatprep.subr.mxu0 0.0
    %214 = vmatpush2.msra.mxu0 0.0
    %215 = vmatprep.subr.mxu0 0.0
    %216 = vmatpush2.msra.mxu0 0.0
    %217 = vmatprep.subr.mxu0 0.0
    %218 = vmatpush2.msra.mxu0 0.0
    %219 = vmatprep.subr.mxu0 0.0
    %220 = vmatpush2.msra.mxu0 0.0
    %221 = vmatprep.subr.mxu0 0.0
    %222 = vmatpush2.msra.mxu0 0.0
    %223 = vmatprep.subr.mxu0 0.0
    %224 = vmatpush2.msra.mxu0 0.0
    %225 = vmatprep.subr.mxu0 0.0
    %226 = vmatpush2.msra.mxu0 0.0
    %227 = vmatprep.subr.mxu0 0.0
    %228 = vmatpush2.msra.mxu0 0.0
    %229 = vmatprep.subr.mxu0 0.0
    %230 = vmatpush2.msra.mxu0 0.0
    %231 = vmatprep.mubr.f32.mxu0 0.0
    %232 = vmatmul.mubr.f32.gmra.mxu0 %v165
    %v233 = vpop.f32.mrf.mxu0
    %v234 = vadd.f32 0.0, %v233
    %v235 = vpop.f32.mrf.mxu0
    %236 = vdwg.mxu0
    %v237 = vsub.f32 %v234, %v155
    %v238 = vmul.f32 %v237, %v237
    %v239 = vsel %vm146, %v238, 0.0
    %v240 = vrot.slane %v239, 4
    %v241 = vadd.f32 %v239, %v240
    %v242 = vrot.slane %v241, 2
    %v243 = vadd.f32 %v241, %v242
    %v244 = vrot.slane %v243, 1
    %v245 = vadd.f32 %v243, %v244
    %vm246 = vcmask 1040384
    %v247 = vsel %vm246, %v153, %v245
    %v248 = vld [vmem:[%s2] sm:$0x3]
    %vm249 = vcmp.ne.f32.partialorder %v248, 0.0
    %v250 = vsel %vm249, %v247, 0.0
    %251 = vst [vmem:[#allocation11] sm:$0x3] %v250
    // Predicated region
    $region30: #{tpu_custom_call.1} parent=1 // pred_check
      _
    $region31: #{tpu_custom_call.1} parent=1 // pred_check_branch
      %253 = sbr.rel (0) target = $region33
    $region32: #{tpu_custom_call.1} parent=1 // pred_region
      %s255 = ssub.s32 32, 32
      %256 = vsyncadd [#allocation7], %s255
      %s258 = sshll.u32 [#allocation11], 4
      %s259 = int_to_ptr.vmem [resolvable:$true] %s258
      %261 = dma.vmem_to_hbm [thread:$0]  %s259, 32, %s5, [#allocation7]
    $region33: #{tpu_custom_call.1} parent=1 // pred_fallthru
      _
    // Predicated region
    $region34: #{tpu_custom_call.1} parent=1 // pred_check
      _
    $region35: #{tpu_custom_call.1} parent=1 // pred_check_branch
      %263 = sbr.rel (0) target = $region37
    $region36: #{tpu_custom_call.1} parent=1 // pred_region
      %264 = dma.done [#allocation7], 32
    $region37: #{tpu_custom_call.1} parent=1 // pred_fallthru
      _
    %265 = vsyncpa [#allocation6], 1
    %266 = vsyncpa [#allocation9], 1
    %267 = vsyncpa [#allocation7], 1

</llo_original>
